<compile_context>
chip_gen: v7x
topology: tpu7x:2x2x1
jax: 0.10.0
libtpu: 0.0.40
codegen_flags: <defaults>
</compile_context>

<pallas_src>
import jax
import jax.numpy as jnp
from jax.experimental import pallas as pl
from jax.experimental.pallas import tpu as pltpu

IN_FEATURES = 784          # 1 * 28 * 28
K_PAD = 896                # 7 * 128 — lane-aligned contraction dim
OUT_FEATURES = 128
MAX_TB = 512               # batch tile: multiple of 8, VMEM-safe on v5e/v6e/v7x


def _round_up(n, m):
    return ((n + m - 1) // m) * m


def linear_relu_kernel(x_ref, w_ref, b_ref, o_ref):
    # x_ref: (TB, 896) bf16, w_ref: (896, 128) bf16, b_ref: (1, 128) f32
    acc = jnp.dot(x_ref[...], w_ref[...], preferred_element_type=jnp.float32)
    acc = acc + b_ref[...]                 # broadcast (1, 128) over rows, f32 epilogue
    o_ref[...] = jnp.maximum(acc, 0.0).astype(o_ref.dtype)


def example_model_forward(x, w_padded_bf16, b):
    """x: (B, C, H, W) float32; w_padded_bf16: (896, 128) bf16; b: (128,) f32."""
    B = x.shape[0]
    x_flat = x.reshape(B, -1)                               # torch.flatten(x, start_dim=1)
    assert x_flat.shape[1] == IN_FEATURES

    # Pick a batch tile: multiple of 8, capped for VMEM safety on all chips.
    TB = min(MAX_TB, _round_up(B, 8))
    B_pad = _round_up(B, TB)

    # Pad batch (rows) and K (lanes) with zeros; zero K-padding keeps the
    # matmul result identical.  Feed the MXU bf16 inputs.
    x_padded = jnp.zeros((B_pad, K_PAD), jnp.float32)
    x_padded = x_padded.at[:B, :IN_FEATURES].set(x_flat)
    x_padded = x_padded.astype(jnp.bfloat16)

    b2d = b.reshape(1, OUT_FEATURES).astype(jnp.float32)

    grid = (B_pad // TB,)

    cost = pl.CostEstimate(
        flops=2 * B_pad * K_PAD * OUT_FEATURES,
        bytes_accessed=(B_pad * K_PAD * 2            # x (bf16)
                        + K_PAD * OUT_FEATURES * 2   # w (bf16)
                        + OUT_FEATURES * 4           # bias (f32)
                        + B_pad * OUT_FEATURES * 4), # out (f32)
        transcendentals=0,
    )

    out = pl.pallas_call(
        linear_relu_kernel,
        out_shape=jax.ShapeDtypeStruct((B_pad, OUT_FEATURES), jnp.float32),
        grid_spec=pltpu.PrefetchScalarGridSpec(
            num_scalar_prefetch=0,
            grid=grid,
            in_specs=[
                # x tile marches with the grid; weight/bias stay resident.
                pl.BlockSpec((TB, K_PAD), lambda i: (i, 0)),
                pl.BlockSpec((K_PAD, OUT_FEATURES), lambda i: (0, 0)),
                pl.BlockSpec((1, OUT_FEATURES), lambda i: (0, 0)),
            ],
            out_specs=pl.BlockSpec((TB, OUT_FEATURES), lambda i: (i, 0)),
        ),
        compiler_params=pltpu.CompilerParams(
            dimension_semantics=("parallel",),   # 2x on v7x megacore, neutral elsewhere
        ),
        cost_estimate=cost,
    )(x_padded, w_padded_bf16, b2d)

    return out[:B]


def init_params(key):
    # Deterministic init mimicking nn.Linear's uniform(-1/sqrt(fan_in), +1/sqrt(fan_in)).
    kw, kb = jax.random.split(key)
    bound = 1.0 / jnp.sqrt(jnp.float32(IN_FEATURES))
    # Stored as (in, out) so the kernel does x @ w directly (PyTorch stores (out, in)).
    w = jax.random.uniform(kw, (IN_FEATURES, OUT_FEATURES), jnp.float32, -bound, bound)
    b = jax.random.uniform(kb, (OUT_FEATURES,), jnp.float32, -bound, bound)
    # Zero-pad K to 896 and store the padded weight as bf16 (halves weight DMA).
    w_padded = jnp.zeros((K_PAD, OUT_FEATURES), jnp.float32).at[:IN_FEATURES, :].set(w)
    return w, w_padded.astype(jnp.bfloat16), b


if __name__ == "__main__":
    key = jax.random.PRNGKey(0)
    kx, kp = jax.random.split(key)

    # Small MNIST-like input implied by Linear(784, 128): (batch=2, 1, 28, 28)
    # NOTE: at this tiny batch plain XLA fusion would beat any Pallas kernel;
    # this kernel is meant for large-batch use where weight DMA / MXU dominate.
    x = jax.random.normal(kx, (2, 1, 28, 28), jnp.float32)
    w_f32, w_padded_bf16, b = init_params(kp)

    out = example_model_forward(x, w_padded_bf16, b)
    out = jax.block_until_ready(out)

    # Reference matching the kernel's bf16-input / f32-accumulate math.
    x_bf16 = x.reshape(2, -1).astype(jnp.bfloat16)
    w_bf16 = w_f32.astype(jnp.bfloat16)
    ref = jnp.maximum(
        jnp.dot(x_bf16, w_bf16, preferred_element_type=jnp.float32) + b, 0.0
    )

    assert out.shape == (2, 128)
    assert out.dtype == jnp.float32
    assert jnp.allclose(out, ref, atol=1e-2, rtol=1e-2)

    print("KERNEL_OK")
</pallas_src>

<mosaic_0001>
module attributes {stable_mosaic.version = 11 : i64} {
  func.func @linear_relu_kernel(%arg0: i32, %arg1: memref<8x896xbf16, #tpu.memory_space<vmem>>, %arg2: memref<896x128xbf16, #tpu.memory_space<vmem>>, %arg3: memref<1x128xf32, #tpu.memory_space<vmem>>, %arg4: memref<8x128xf32, #tpu.memory_space<vmem>>) attributes {dimension_semantics = [#tpu.dimension_semantics<parallel>], iteration_bounds = array<i64: 1>, scalar_prefetch = 0 : i64, scratch_operands = 0 : i64, tpu.core_type = #tpu.core_type<tc>, window_params = [{transform_indices = @transform_0, window_bounds = array<i64: 8, 896>}, {pipeline_mode = #tpu.pipeline_mode<synchronous>, transform_indices = @transform_1, window_bounds = array<i64: 896, 128>}, {pipeline_mode = #tpu.pipeline_mode<synchronous>, transform_indices = @transform_2, window_bounds = array<i64: 1, 128>}, {transform_indices = @transform_3, window_bounds = array<i64: 8, 128>}]} {
    %c0 = arith.constant 0 : index
    %c0_0 = arith.constant 0 : index
    %0 = vector.load %arg1[%c0, %c0_0] : memref<8x896xbf16, #tpu.memory_space<vmem>>, vector<8x896xbf16>
    %c0_1 = arith.constant 0 : index
    %c0_2 = arith.constant 0 : index
    %1 = vector.load %arg2[%c0_1, %c0_2] : memref<896x128xbf16, #tpu.memory_space<vmem>>, vector<896x128xbf16>
    %cst = arith.constant dense<0.000000e+00> : vector<8x128xf32>
    %2 = tpu.matmul %0, %1, %cst {dimension_numbers = #tpu.dot_dimension_numbers<[1], [0], [0], [1], [0, 0, 1, 1], [], []>} : vector<8x896xbf16>, vector<896x128xbf16>, vector<8x128xf32> -> vector<8x128xf32>
    %c0_3 = arith.constant 0 : index
    %c0_4 = arith.constant 0 : index
    %3 = vector.load %arg3[%c0_3, %c0_4] : memref<1x128xf32, #tpu.memory_space<vmem>>, vector<1x128xf32>
    %4 = vector.broadcast %3 : vector<1x128xf32> to vector<8x128xf32>
    %5 = arith.addf %2, %4 : vector<8x128xf32>
    %cst_5 = arith.constant 0.000000e+00 : f32
    %6 = vector.broadcast %cst_5 : f32 to vector<8x128xf32>
    %7 = arith.maximumf %5, %6 : vector<8x128xf32>
    %c0_6 = arith.constant 0 : index
    %c0_7 = arith.constant 0 : index
    %8 = vector.load %arg4[%c0_6, %c0_7] : memref<8x128xf32, #tpu.memory_space<vmem>>, vector<8x128xf32>
    tpu.vector_store %arg4[%c0_6, %c0_7], %7 {strides = array<i32>} : memref<8x128xf32, #tpu.memory_space<vmem>>, vector<8x128xf32>,
    return
  }
  func.func @transform_0(%arg0: i32) -> (i32, i32) {
    %c0_i32 = arith.constant 0 : i32
    %c0_i32_0 = arith.constant 0 : i32
    return %arg0, %c0_i32 : i32, i32
  }
  func.func @transform_1(%arg0: i32) -> (i32, i32) {
    %c0_i32 = arith.constant 0 : i32
    %c0_i32_0 = arith.constant 0 : i32
    %c0_i32_1 = arith.constant 0 : i32
    return %c0_i32, %c0_i32_0 : i32, i32
  }
  func.func @transform_2(%arg0: i32) -> (i32, i32) {
    %c0_i32 = arith.constant 0 : i32
    %c0_i32_0 = arith.constant 0 : i32
    %c0_i32_1 = arith.constant 0 : i32
    return %c0_i32, %c0_i32_0 : i32, i32
  }
  func.func @transform_3(%arg0: i32) -> (i32, i32) {
    %c0_i32 = arith.constant 0 : i32
    %c0_i32_0 = arith.constant 0 : i32
    return %arg0, %c0_i32 : i32, i32
  }
}

</mosaic_0001>

<llo_original>
// kernel: tpu_custom_call.1
$region0: #{tpu_custom_call.1}
  #allocation0 [shape = 'u32[]', space=smem, size = 0x4, offset = 0x4, fixed_abs, tag = 'smem constant byte address 0x4 - core index']
  #allocation1 [shape = 'u32[144,128]{1,0:T(1,128)}', space=vmem, size = 0x12000, scoped, tag = 'internal scratch']
  %s0 = inlined_call_operand.hbm [shape: bf16[8,896], index: 0, kind: input, shape index: {}]
  %s1 = inlined_call_operand.hbm [shape: bf16[896,128], index: 1, kind: input, shape index: {}]
  %s2 = inlined_call_operand.vmem [shape: f32[1,128], index: 2, kind: input, shape index: {}]
  %s3 = inlined_call_operand.hbm [shape: f32[8,128], index: 3, kind: output, shape index: {}]
  %s4 = sld [smem:[#allocation0]]
  $region30: #{tpu_custom_call.1} parent=0
    _
  %s6 = ssub.s32 1, %s4
  %s7 = scalar_select 0, %s6, %s4
  $region1: #{tpu_custom_call.1} parent=0
    #allocation2 [shape = 'u8[14336]{0}', space=vmem, size = 0x3800, scoped, tag = 'input window, operand 0, single buffered']
    #allocation3 [shape = 's32[1]{0}', space=sflag, size = 0x4, scoped, tag = 'scoped memory for tpu_custom_call.1']
    #allocation4 [shape = 's32[1]{0}', space=sflag, size = 0x4, scoped, tag = 'scoped memory for tpu_custom_call.1']
    #allocation5 [shape = 'u8[229376]{0}', space=vmem, size = 0x38000, scoped, tag = 'input window, operand 1, single buffered']
    #allocation6 [shape = 's32[1]{0}', space=sflag, size = 0x4, scoped, tag = 'scoped memory for tpu_custom_call.1']
    #allocation7 [shape = 'u8[4096]{0}', space=vmem, size = 0x1000, scoped, tag = 'output window, operand 0, single buffered']
    %8 = vsyncpa [#allocation3], 0
    %9 = vsyncpa [#allocation6], 0
    %10 = vsyncpa [#allocation4], 0
    // Predicated region
    $region2: #{tpu_custom_call.1} parent=1 // pred_check
      _
    $region3: #{tpu_custom_call.1} parent=1 // pred_check_branch
      %12 = sbr.rel (0) target = $region5
    $region4: #{tpu_custom_call.1} parent=1 // pred_region
      %s14 = ssub.s32 448, 448
      %15 = vsyncadd [#allocation3], %s14
      %s17 = sshll.u32 [#allocation2], 4
      %s18 = int_to_ptr.vmem [resolvable:$true] %s17
      %20 = dma.hbm_to_vmem [thread:$0]  %s0, 448, %s18, [#allocation3]
    $region5: #{tpu_custom_call.1} parent=1 // pred_fallthru
      _
    // Predicated region
    $region6: #{tpu_custom_call.1} parent=1 // pred_check
      _
    $region7: #{tpu_custom_call.1} parent=1 // pred_check_branch
      %22 = sbr.rel (0) target = $region9
    $region8: #{tpu_custom_call.1} parent=1 // pred_region
      %s24 = ssub.s32 7168, 7168
      %25 = vsyncadd [#allocation6], %s24
      %s26 = sshll.u32 [#allocation5], 4
      %s27 = int_to_ptr.vmem [resolvable:$true] %s26
      %32 = dma.hbm_to_vmem [thread:$0]  %s1, 7168, %s27, [#allocation6], 64, 64, 4
    $region9: #{tpu_custom_call.1} parent=1 // pred_fallthru
      _
    // Predicated region
    $region10: #{tpu_custom_call.1} parent=1 // pred_check
      _
    $region11: #{tpu_custom_call.1} parent=1 // pred_check_branch
      %34 = sbr.rel (0) target = $region13
    $region12: #{tpu_custom_call.1} parent=1 // pred_region
      _
    $region13: #{tpu_custom_call.1} parent=1 // pred_fallthru
      _
    // Predicated region
    $region14: #{tpu_custom_call.1} parent=1 // pred_check
      _
    $region15: #{tpu_custom_call.1} parent=1 // pred_check_branch
      %36 = sbr.rel (0) target = $region17
    $region16: #{tpu_custom_call.1} parent=1 // pred_region
      %37 = dma.done [#allocation3], 448
    $region17: #{tpu_custom_call.1} parent=1 // pred_fallthru
      _
    // Predicated region
    $region18: #{tpu_custom_call.1} parent=1 // pred_check
      _
    $region19: #{tpu_custom_call.1} parent=1 // pred_check_branch
      %39 = sbr.rel (0) target = $region21
    $region20: #{tpu_custom_call.1} parent=1 // pred_region
      %40 = dma.done [#allocation6], 7168
    $region21: #{tpu_custom_call.1} parent=1 // pred_fallthru
      _
    %v42 = vld [vmem:[#allocation2] sm:$0xff]
    %v43 = vld [vmem:[#allocation2 + $0x8] sm:$0xff]
    %v44 = vld [vmem:[#allocation2 + $0x10] sm:$0xff]
    %v45 = vld [vmem:[#allocation2 + $0x18] sm:$0xf]
    %v46 = vld [vmem:[#allocation5] sm:$0xf]
    %v47 = vld [vmem:[#allocation5 + $0x4] sm:$0xf]
    %v48 = vld [vmem:[#allocation5 + $0x8] sm:$0xf]
    %v49 = vld [vmem:[#allocation5 + $0xc] sm:$0xf]
    %v50 = vld [vmem:[#allocation5 + $0x10] sm:$0xf]
    %v51 = vld [vmem:[#allocation5 + $0x14] sm:$0xf]
    %v52 = vld [vmem:[#allocation5 + $0x18] sm:$0xf]
    %v53 = vld [vmem:[#allocation5 + $0x1c] sm:$0xf]
    %v54 = vld [vmem:[#allocation5 + $0x20] sm:$0xf]
    %v55 = vld [vmem:[#allocation5 + $0x24] sm:$0xf]
    %v56 = vld [vmem:[#allocation5 + $0x28] sm:$0xf]
    %v57 = vld [vmem:[#allocation5 + $0x2c] sm:$0xf]
    %v58 = vld [vmem:[#allocation5 + $0x30] sm:$0xf]
    %v59 = vld [vmem:[#allocation5 + $0x34] sm:$0xf]
    %v60 = vld [vmem:[#allocation5 + $0x38] sm:$0xf]
    %v61 = vld [vmem:[#allocation5 + $0x3c] sm:$0xf]
    %v62 = vld [vmem:[#allocation5 + $0x40] sm:$0xf]
    %v63 = vld [vmem:[#allocation5 + $0x44] sm:$0xf]
    %v64 = vld [vmem:[#allocation5 + $0x48] sm:$0xf]
    %v65 = vld [vmem:[#allocation5 + $0x4c] sm:$0xf]
    %v66 = vld [vmem:[#allocation5 + $0x50] sm:$0xf]
    %v67 = vld [vmem:[#allocation5 + $0x54] sm:$0xf]
    %v68 = vld [vmem:[#allocation5 + $0x58] sm:$0xf]
    %v69 = vld [vmem:[#allocation5 + $0x5c] sm:$0xf]
    %v70 = vld [vmem:[#allocation5 + $0x60] sm:$0xf]
    %v71 = vld [vmem:[#allocation5 + $0x64] sm:$0xf]
    %v72 = vld [vmem:[#allocation5 + $0x68] sm:$0xf]
    %v73 = vld [vmem:[#allocation5 + $0x6c] sm:$0xf]
    %v74 = vld [vmem:[#allocation5 + $0x70] sm:$0xf]
    %v75 = vld [vmem:[#allocation5 + $0x74] sm:$0xf]
    %v76 = vld [vmem:[#allocation5 + $0x78] sm:$0xf]
    %v77 = vld [vmem:[#allocation5 + $0x7c] sm:$0xf]
    %v78 = vld [vmem:[#allocation5 + $0x80] sm:$0xf]
    %v79 = vld [vmem:[#allocation5 + $0x84] sm:$0xf]
    %v80 = vld [vmem:[#allocation5 + $0x88] sm:$0xf]
    %v81 = vld [vmem:[#allocation5 + $0x8c] sm:$0xf]
    %v82 = vld [vmem:[#allocation5 + $0x90] sm:$0xf]
    %v83 = vld [vmem:[#allocation5 + $0x94] sm:$0xf]
    %v84 = vld [vmem:[#allocation5 + $0x98] sm:$0xf]
    %v85 = vld [vmem:[#allocation5 + $0x9c] sm:$0xf]
    %v86 = vld [vmem:[#allocation5 + $0xa0] sm:$0xf]
    %v87 = vld [vmem:[#allocation5 + $0xa4] sm:$0xf]
    %v88 = vld [vmem:[#allocation5 + $0xa8] sm:$0xf]
    %v89 = vld [vmem:[#allocation5 + $0xac] sm:$0xf]
    %v90 = vld [vmem:[#allocation5 + $0xb0] sm:$0xf]
    %v91 = vld [vmem:[#allocation5 + $0xb4] sm:$0xf]
    %v92 = vld [vmem:[#allocation5 + $0xb8] sm:$0xf]
    %v93 = vld [vmem:[#allocation5 + $0xbc] sm:$0xf]
    %v94 = vld [vmem:[#allocation5 + $0xc0] sm:$0xf]
    %v95 = vld [vmem:[#allocation5 + $0xc4] sm:$0xf]
    %v96 = vld [vmem:[#allocation5 + $0xc8] sm:$0xf]
    %v97 = vld [vmem:[#allocation5 + $0xcc] sm:$0xf]
    %v98 = vld [vmem:[#allocation5 + $0xd0] sm:$0xf]
    %v99 = vld [vmem:[#allocation5 + $0xd4] sm:$0xf]
    %v100 = vld [vmem:[#allocation5 + $0xd8] sm:$0xf]
    %v101 = vld [vmem:[#allocation5 + $0xdc] sm:$0xf]
    %v102 = vld [vmem:[#allocation5 + $0xe0] sm:$0xf]
    %v103 = vld [vmem:[#allocation5 + $0xe4] sm:$0xf]
    %v104 = vld [vmem:[#allocation5 + $0xe8] sm:$0xf]
    %v105 = vld [vmem:[#allocation5 + $0xec] sm:$0xf]
    %v106 = vld [vmem:[#allocation5 + $0xf0] sm:$0xf]
    %v107 = vld [vmem:[#allocation5 + $0xf4] sm:$0xf]
    %v108 = vld [vmem:[#allocation5 + $0xf8] sm:$0xf]
    %v109 = vld [vmem:[#allocation5 + $0xfc] sm:$0xf]
    %v110 = vld [vmem:[#allocation5 + $0x100] sm:$0xf]
    %v111 = vld [vmem:[#allocation5 + $0x104] sm:$0xf]
    %v112 = vld [vmem:[#allocation5 + $0x108] sm:$0xf]
    %v113 = vld [vmem:[#allocation5 + $0x10c] sm:$0xf]
    %v114 = vld [vmem:[#allocation5 + $0x110] sm:$0xf]
    %v115 = vld [vmem:[#allocation5 + $0x114] sm:$0xf]
    %v116 = vld [vmem:[#allocation5 + $0x118] sm:$0xf]
    %v117 = vld [vmem:[#allocation5 + $0x11c] sm:$0xf]
    %v118 = vld [vmem:[#allocation5 + $0x120] sm:$0xf]
    %v119 = vld [vmem:[#allocation5 + $0x124] sm:$0xf]
    %v120 = vld [vmem:[#allocation5 + $0x128] sm:$0xf]
    %v121 = vld [vmem:[#allocation5 + $0x12c] sm:$0xf]
    %v122 = vld [vmem:[#allocation5 + $0x130] sm:$0xf]
    %v123 = vld [vmem:[#allocation5 + $0x134] sm:$0xf]
    %v124 = vld [vmem:[#allocation5 + $0x138] sm:$0xf]
    %v125 = vld [vmem:[#allocation5 + $0x13c] sm:$0xf]
    %v126 = vld [vmem:[#allocation5 + $0x140] sm:$0xf]
    %v127 = vld [vmem:[#allocation5 + $0x144] sm:$0xf]
    %v128 = vld [vmem:[#allocation5 + $0x148] sm:$0xf]
    %v129 = vld [vmem:[#allocation5 + $0x14c] sm:$0xf]
    %v130 = vld [vmem:[#allocation5 + $0x150] sm:$0xf]
    %v131 = vld [vmem:[#allocation5 + $0x154] sm:$0xf]
    %v132 = vld [vmem:[#allocation5 + $0x158] sm:$0xf]
    %v133 = vld [vmem:[#allocation5 + $0x15c] sm:$0xf]
    %v134 = vld [vmem:[#allocation5 + $0x160] sm:$0xf]
    %v135 = vld [vmem:[#allocation5 + $0x164] sm:$0xf]
    %v136 = vld [vmem:[#allocation5 + $0x168] sm:$0xf]
    %v137 = vld [vmem:[#allocation5 + $0x16c] sm:$0xf]
    %v138 = vld [vmem:[#allocation5 + $0x170] sm:$0xf]
    %v139 = vld [vmem:[#allocation5 + $0x174] sm:$0xf]
    %v140 = vld [vmem:[#allocation5 + $0x178] sm:$0xf]
    %v141 = vld [vmem:[#allocation5 + $0x17c] sm:$0xf]
    %v142 = vld [vmem:[#allocation5 + $0x180] sm:$0xf]
    %v143 = vld [vmem:[#allocation5 + $0x184] sm:$0xf]
    %v144 = vld [vmem:[#allocation5 + $0x188] sm:$0xf]
    %v145 = vld [vmem:[#allocation5 + $0x18c] sm:$0xf]
    %v146 = vld [vmem:[#allocation5 + $0x190] sm:$0xf]
    %v147 = vld [vmem:[#allocation5 + $0x194] sm:$0xf]
    %v148 = vld [vmem:[#allocation5 + $0x198] sm:$0xf]
    %v149 = vld [vmem:[#allocation5 + $0x19c] sm:$0xf]
    %v150 = vld [vmem:[#allocation5 + $0x1a0] sm:$0xf]
    %v151 = vld [vmem:[#allocation5 + $0x1a4] sm:$0xf]
    %v152 = vld [vmem:[#allocation5 + $0x1a8] sm:$0xf]
    %v153 = vld [vmem:[#allocation5 + $0x1ac] sm:$0xf]
    %v154 = vld [vmem:[#allocation5 + $0x1b0] sm:$0xf]
    %v155 = vld [vmem:[#allocation5 + $0x1b4] sm:$0xf]
    %v156 = vld [vmem:[#allocation5 + $0x1b8] sm:$0xf]
    %v157 = vld [vmem:[#allocation5 + $0x1bc] sm:$0xf]
    %v158 = vld [vmem:[%s2] sm:$0x1]
    %v160 = vlaneseq
    %v161 = vshrl.u32 %v160, 7
    %v162 = vsub.s32 0, %v161
    %v163 = vrot.slane %v158, %v162
    %v169 = vunpack.c.l.b16 %v42
    %v170 = vunpack.c.h.b16 %v42
    %v171 = vunpack.c.l.b16 %v43
    %v172 = vunpack.c.h.b16 %v43
    %v173 = vunpack.c.l.b16 %v44
    %v174 = vunpack.c.h.b16 %v44
    %v175 = vunpack.c.l.b16 %v45
    %v176 = vpack.c.b16 %v169, %v169
    %v177 = vpack.c.b16 %v170, %v170
    %v178 = vpack.c.b16 %v171, %v171
    %v179 = vpack.c.b16 %v172, %v172
    %v180 = vpack.c.b16 %v173, %v173
    %v181 = vpack.c.b16 %v174, %v174
    %v182 = vpack.c.b16 %v175, %v175
    %v302 = vunpack.c.l.b16 %v46
    %v303 = vunpack.c.l.b16 %v47
    %v304 = vunpack.c.l.b16 %v48
    %v305 = vunpack.c.l.b16 %v49
    %v306 = vunpack.c.l.b16 %v50
    %v307 = vunpack.c.l.b16 %v51
    %v308 = vunpack.c.l.b16 %v52
    %v309 = vunpack.c.l.b16 %v53
    %v310 = vunpack.c.l.b16 %v54
    %v311 = vunpack.c.l.b16 %v55
    %v312 = vunpack.c.l.b16 %v56
    %v313 = vunpack.c.l.b16 %v57
    %v314 = vunpack.c.l.b16 %v58
    %v315 = vunpack.c.l.b16 %v59
    %v316 = vunpack.c.l.b16 %v60
    %v317 = vunpack.c.l.b16 %v61
    %v318 = vunpack.c.l.b16 %v62
    %v319 = vunpack.c.l.b16 %v63
    %v320 = vunpack.c.l.b16 %v64
    %v321 = vunpack.c.l.b16 %v65
    %v322 = vunpack.c.l.b16 %v66
    %v323 = vunpack.c.l.b16 %v67
    %v324 = vunpack.c.l.b16 %v68
    %v325 = vunpack.c.l.b16 %v69
    %v326 = vunpack.c.l.b16 %v70
    %v327 = vunpack.c.l.b16 %v71
    %v328 = vunpack.c.l.b16 %v72
    %v329 = vunpack.c.l.b16 %v73
    %v330 = vunpack.c.l.b16 %v74
    %v331 = vunpack.c.l.b16 %v75
    %v332 = vunpack.c.l.b16 %v76
    %v333 = vunpack.c.l.b16 %v77
    %v334 = vunpack.c.l.b16 %v78
    %v335 = vunpack.c.l.b16 %v79
    %v336 = vunpack.c.l.b16 %v80
    %v337 = vunpack.c.l.b16 %v81
    %v338 = vunpack.c.l.b16 %v82
    %v339 = vunpack.c.l.b16 %v83
    %v340 = vunpack.c.l.b16 %v84
    %v341 = vunpack.c.l.b16 %v85
    %v342 = vunpack.c.l.b16 %v86
    %v343 = vunpack.c.l.b16 %v87
    %v344 = vunpack.c.l.b16 %v88
    %v345 = vunpack.c.l.b16 %v89
    %v346 = vunpack.c.l.b16 %v90
    %v347 = vunpack.c.l.b16 %v91
    %v348 = vunpack.c.l.b16 %v92
    %v349 = vunpack.c.l.b16 %v93
    %v350 = vunpack.c.l.b16 %v94
    %v351 = vunpack.c.l.b16 %v95
    %v352 = vunpack.c.l.b16 %v96
    %v353 = vunpack.c.l.b16 %v97
    %v354 = vunpack.c.l.b16 %v98
    %v355 = vunpack.c.l.b16 %v99
    %v356 = vunpack.c.l.b16 %v100
    %v357 = vunpack.c.l.b16 %v101
    %v358 = vunpack.c.l.b16 %v102
    %v359 = vunpack.c.l.b16 %v103
    %v360 = vunpack.c.l.b16 %v104
    %v361 = vunpack.c.l.b16 %v105
    %v362 = vunpack.c.l.b16 %v106
    %v363 = vunpack.c.l.b16 %v107
    %v364 = vunpack.c.l.b16 %v108
    %v365 = vunpack.c.l.b16 %v109
    %v366 = vunpack.c.l.b16 %v110
    %v367 = vunpack.c.l.b16 %v111
    %v368 = vunpack.c.l.b16 %v112
    %v369 = vunpack.c.l.b16 %v113
    %v370 = vunpack.c.l.b16 %v114
    %v371 = vunpack.c.l.b16 %v115
    %v372 = vunpack.c.l.b16 %v116
    %v373 = vunpack.c.l.b16 %v117
    %v374 = vunpack.c.l.b16 %v118
    %v375 = vunpack.c.l.b16 %v119
    %v376 = vunpack.c.l.b16 %v120
    %v377 = vunpack.c.l.b16 %v121
    %v378 = vunpack.c.l.b16 %v122
    %v379 = vunpack.c.l.b16 %v123
    %v380 = vunpack.c.l.b16 %v124
    %v381 = vunpack.c.l.b16 %v125
    %v382 = vunpack.c.l.b16 %v126
    %v383 = vunpack.c.l.b16 %v127
    %v384 = vunpack.c.l.b16 %v128
    %v385 = vunpack.c.l.b16 %v129
    %v386 = vunpack.c.l.b16 %v130
    %v387 = vunpack.c.l.b16 %v131
    %v388 = vunpack.c.l.b16 %v132
    %v389 = vunpack.c.l.b16 %v133
    %v390 = vunpack.c.l.b16 %v134
    %v391 = vunpack.c.l.b16 %v135
    %v392 = vunpack.c.l.b16 %v136
    %v393 = vunpack.c.l.b16 %v137
    %v394 = vunpack.c.l.b16 %v138
    %v395 = vunpack.c.l.b16 %v139
    %v396 = vunpack.c.l.b16 %v140
    %v397 = vunpack.c.l.b16 %v141
    %v398 = vunpack.c.l.b16 %v142
    %v399 = vunpack.c.l.b16 %v143
    %v400 = vunpack.c.l.b16 %v144
    %v401 = vunpack.c.l.b16 %v145
    %v402 = vunpack.c.l.b16 %v146
    %v403 = vunpack.c.l.b16 %v147
    %v404 = vunpack.c.l.b16 %v148
    %v405 = vunpack.c.l.b16 %v149
    %v406 = vunpack.c.l.b16 %v150
    %v407 = vunpack.c.l.b16 %v151
    %v408 = vunpack.c.l.b16 %v152
    %v409 = vunpack.c.l.b16 %v153
    %v410 = vunpack.c.l.b16 %v154
    %v411 = vunpack.c.l.b16 %v155
    %v412 = vunpack.c.l.b16 %v156
    %v413 = vunpack.c.l.b16 %v157
    %v414 = vpack.c.b16 %v303, %v302
    %v415 = vpack.c.b16 %v305, %v304
    %v416 = vpack.c.b16 %v307, %v306
    %v417 = vpack.c.b16 %v309, %v308
    %v418 = vpack.c.b16 %v311, %v310
    %v419 = vpack.c.b16 %v313, %v312
    %v420 = vpack.c.b16 %v315, %v314
    %v421 = vpack.c.b16 %v317, %v316
    %v422 = vpack.c.b16 %v319, %v318
    %v423 = vpack.c.b16 %v321, %v320
    %v424 = vpack.c.b16 %v323, %v322
    %v425 = vpack.c.b16 %v325, %v324
    %v426 = vpack.c.b16 %v327, %v326
    %v427 = vpack.c.b16 %v329, %v328
    %v428 = vpack.c.b16 %v331, %v330
    %v429 = vpack.c.b16 %v333, %v332
    %v430 = vpack.c.b16 %v335, %v334
    %v431 = vpack.c.b16 %v337, %v336
    %v432 = vpack.c.b16 %v339, %v338
    %v433 = vpack.c.b16 %v341, %v340
    %v434 = vpack.c.b16 %v343, %v342
    %v435 = vpack.c.b16 %v345, %v344
    %v436 = vpack.c.b16 %v347, %v346
    %v437 = vpack.c.b16 %v349, %v348
    %v438 = vpack.c.b16 %v351, %v350
    %v439 = vpack.c.b16 %v353, %v352
    %v440 = vpack.c.b16 %v355, %v354
    %v441 = vpack.c.b16 %v357, %v356
    %v442 = vpack.c.b16 %v359, %v358
    %v443 = vpack.c.b16 %v361, %v360
    %v444 = vpack.c.b16 %v363, %v362
    %v445 = vpack.c.b16 %v365, %v364
    %v446 = vpack.c.b16 %v367, %v366
    %v447 = vpack.c.b16 %v369, %v368
    %v448 = vpack.c.b16 %v371, %v370
    %v449 = vpack.c.b16 %v373, %v372
    %v450 = vpack.c.b16 %v375, %v374
    %v451 = vpack.c.b16 %v377, %v376
    %v452 = vpack.c.b16 %v379, %v378
    %v453 = vpack.c.b16 %v381, %v380
    %v454 = vpack.c.b16 %v383, %v382
    %v455 = vpack.c.b16 %v385, %v384
    %v456 = vpack.c.b16 %v387, %v386
    %v457 = vpack.c.b16 %v389, %v388
    %v458 = vpack.c.b16 %v391, %v390
    %v459 = vpack.c.b16 %v393, %v392
    %v460 = vpack.c.b16 %v395, %v394
    %v461 = vpack.c.b16 %v397, %v396
    %v462 = vpack.c.b16 %v399, %v398
    %v463 = vpack.c.b16 %v401, %v400
    %v464 = vpack.c.b16 %v403, %v402
    %v465 = vpack.c.b16 %v405, %v404
    %v466 = vpack.c.b16 %v407, %v406
    %v467 = vpack.c.b16 %v409, %v408
    %v468 = vpack.c.b16 %v411, %v410
    %v469 = vpack.c.b16 %v413, %v412
    %526 = vmatprep.subr.bf16.mxu0 0
    %527 = vmatpush1.bf16.msra.mxu0 %v414
    %528 = vmatprep.subr.bf16.mxu0 0
    %529 = vmatpush1.bf16.msra.mxu0 %v415
    %530 = vmatprep.subr.bf16.mxu0 0
    %531 = vmatpush1.bf16.msra.mxu0 %v416
    %532 = vmatprep.subr.bf16.mxu0 0
    %533 = vmatpush1.bf16.msra.mxu0 %v417
    %534 = vmatprep.subr.bf16.mxu0 0
    %535 = vmatpush1.bf16.msra.mxu0 %v418
    %536 = vmatprep.subr.bf16.mxu0 0
    %537 = vmatpush1.bf16.msra.mxu0 %v419
    %538 = vmatprep.subr.bf16.mxu0 0
    %539 = vmatpush1.bf16.msra.mxu0 %v420
    %540 = vmatprep.subr.bf16.mxu0 0
    %541 = vmatpush1.bf16.msra.mxu0 %v421
    %542 = vmatprep.subr.bf16.mxu0 0
    %543 = vmatpush1.bf16.msra.mxu0 %v422
    %544 = vmatprep.subr.bf16.mxu0 0
    %545 = vmatpush1.bf16.msra.mxu0 %v423
    %546 = vmatprep.subr.bf16.mxu0 0
    %547 = vmatpush1.bf16.msra.mxu0 %v424
    %548 = vmatprep.subr.bf16.mxu0 0
    %549 = vmatpush1.bf16.msra.mxu0 %v425
    %550 = vmatprep.subr.bf16.mxu0 0
    %551 = vmatpush1.bf16.msra.mxu0 %v426
    %552 = vmatprep.subr.bf16.mxu0 0
    %553 = vmatpush1.bf16.msra.mxu0 %v427
    %554 = vmatprep.subr.bf16.mxu0 0
    %555 = vmatpush1.bf16.msra.mxu0 %v428
    %556 = vmatprep.subr.bf16.mxu0 0
    %557 = vmatpush1.bf16.msra.mxu0 %v429
    %558 = vmatprep.mubr.bf16.mxu0 %v177
    %559 = vmatmul.mubr.bf16.gmra.mrb[0].mxu0 %v176
    %v560 = vpop.f32.mrb[0].mxu0
    %v561 = vadd.f32 %v163, %v560
    %v562 = vpop.f32.mrb[0].mxu0
    %v563 = vpop.f32.mrb[0].mxu0
    %v564 = vpop.f32.mrb[0].mxu0
    %565 = vdwg.mxu0
    %566 = vmatprep.subr.bf16.mxu0 0
    %567 = vmatpush1.bf16.msra.mxu0 %v430
    %568 = vmatprep.subr.bf16.mxu0 0
    %569 = vmatpush1.bf16.msra.mxu0 %v431
    %570 = vmatprep.subr.bf16.mxu0 0
    %571 = vmatpush1.bf16.msra.mxu0 %v432
    %572 = vmatprep.subr.bf16.mxu0 0
    %573 = vmatpush1.bf16.msra.mxu0 %v433
    %574 = vmatprep.subr.bf16.mxu0 0
    %575 = vmatpush1.bf16.msra.mxu0 %v434
    %576 = vmatprep.subr.bf16.mxu0 0
    %577 = vmatpush1.bf16.msra.mxu0 %v435
    %578 = vmatprep.subr.bf16.mxu0 0
    %579 = vmatpush1.bf16.msra.mxu0 %v436
    %580 = vmatprep.subr.bf16.mxu0 0
    %581 = vmatpush1.bf16.msra.mxu0 %v437
    %582 = vmatprep.subr.bf16.mxu0 0
    %583 = vmatpush1.bf16.msra.mxu0 %v438
    %584 = vmatprep.subr.bf16.mxu0 0
    %585 = vmatpush1.bf16.msra.mxu0 %v439
    %586 = vmatprep.subr.bf16.mxu0 0
    %587 = vmatpush1.bf16.msra.mxu0 %v440
    %588 = vmatprep.subr.bf16.mxu0 0
    %589 = vmatpush1.bf16.msra.mxu0 %v441
    %590 = vmatprep.subr.bf16.mxu0 0
    %591 = vmatpush1.bf16.msra.mxu0 %v442
    %592 = vmatprep.subr.bf16.mxu0 0
    %593 = vmatpush1.bf16.msra.mxu0 %v443
    %594 = vmatprep.subr.bf16.mxu0 0
    %595 = vmatpush1.bf16.msra.mxu0 %v444
    %596 = vmatprep.subr.bf16.mxu0 0
    %597 = vmatpush1.bf16.msra.mxu0 %v445
    %598 = vmatprep.mubr.bf16.mxu0 %v179
    %599 = vmatmul.mubr.bf16.gmra.mrb[0].mxu0 %v178
    %v600 = vpop.f32.mrb[0].mxu0
    %v601 = vadd.f32 %v561, %v600
    %v602 = vpop.f32.mrb[0].mxu0
    %v603 = vpop.f32.mrb[0].mxu0
    %v604 = vpop.f32.mrb[0].mxu0
    %605 = vdwg.mxu0
    %606 = vmatprep.subr.bf16.mxu0 0
    %607 = vmatpush1.bf16.msra.mxu0 %v446
    %608 = vmatprep.subr.bf16.mxu0 0
    %609 = vmatpush1.bf16.msra.mxu0 %v447
    %610 = vmatprep.subr.bf16.mxu0 0
    %611 = vmatpush1.bf16.msra.mxu0 %v448
    %612 = vmatprep.subr.bf16.mxu0 0
    %613 = vmatpush1.bf16.msra.mxu0 %v449
    %614 = vmatprep.subr.bf16.mxu0 0
    %615 = vmatpush1.bf16.msra.mxu0 %v450
    %616 = vmatprep.subr.bf16.mxu0 0
    %617 = vmatpush1.bf16.msra.mxu0 %v451
    %618 = vmatprep.subr.bf16.mxu0 0
    %619 = vmatpush1.bf16.msra.mxu0 %v452
    %620 = vmatprep.subr.bf16.mxu0 0
    %621 = vmatpush1.bf16.msra.mxu0 %v453
    %622 = vmatprep.subr.bf16.mxu0 0
    %623 = vmatpush1.bf16.msra.mxu0 %v454
    %624 = vmatprep.subr.bf16.mxu0 0
    %625 = vmatpush1.bf16.msra.mxu0 %v455
    %626 = vmatprep.subr.bf16.mxu0 0
    %627 = vmatpush1.bf16.msra.mxu0 %v456
    %628 = vmatprep.subr.bf16.mxu0 0
    %629 = vmatpush1.bf16.msra.mxu0 %v457
    %630 = vmatprep.subr.bf16.mxu0 0
    %631 = vmatpush1.bf16.msra.mxu0 %v458
    %632 = vmatprep.subr.bf16.mxu0 0
    %633 = vmatpush1.bf16.msra.mxu0 %v459
    %634 = vmatprep.subr.bf16.mxu0 0
    %635 = vmatpush1.bf16.msra.mxu0 %v460
    %636 = vmatprep.subr.bf16.mxu0 0
    %637 = vmatpush1.bf16.msra.mxu0 %v461
    %638 = vmatprep.mubr.bf16.mxu0 %v181
    %639 = vmatmul.mubr.bf16.gmra.mrb[0].mxu0 %v180
    %v640 = vpop.f32.mrb[0].mxu0
    %v641 = vadd.f32 %v601, %v640
    %v642 = vpop.f32.mrb[0].mxu0
    %v643 = vpop.f32.mrb[0].mxu0
    %v644 = vpop.f32.mrb[0].mxu0
    %645 = vdwg.mxu0
    %646 = vmatprep.subr.bf16.mxu0 0
    %647 = vmatpush1.bf16.msra.mxu0 %v462
    %648 = vmatprep.subr.bf16.mxu0 0
    %649 = vmatpush1.bf16.msra.mxu0 %v463
    %650 = vmatprep.subr.bf16.mxu0 0
    %651 = vmatpush1.bf16.msra.mxu0 %v464
    %652 = vmatprep.subr.bf16.mxu0 0
    %653 = vmatpush1.bf16.msra.mxu0 %v465
    %654 = vmatprep.subr.bf16.mxu0 0
    %655 = vmatpush1.bf16.msra.mxu0 %v466
    %656 = vmatprep.subr.bf16.mxu0 0
    %657 = vmatpush1.bf16.msra.mxu0 %v467
    %658 = vmatprep.subr.bf16.mxu0 0
    %659 = vmatpush1.bf16.msra.mxu0 %v468
    %660 = vmatprep.subr.bf16.mxu0 0
    %661 = vmatpush1.bf16.msra.mxu0 %v469
    %662 = vmatprep.subr.bf16.mxu0 0
    %663 = vmatpush1.bf16.msra.mxu0 0
    %664 = vmatprep.subr.bf16.mxu0 0
    %665 = vmatpush1.bf16.msra.mxu0 0
    %666 = vmatprep.subr.bf16.mxu0 0
    %667 = vmatpush1.bf16.msra.mxu0 0
    %668 = vmatprep.subr.bf16.mxu0 0
    %669 = vmatpush1.bf16.msra.mxu0 0
    %670 = vmatprep.subr.bf16.mxu0 0
    %671 = vmatpush1.bf16.msra.mxu0 0
    %672 = vmatprep.subr.bf16.mxu0 0
    %673 = vmatpush1.bf16.msra.mxu0 0
    %674 = vmatprep.subr.bf16.mxu0 0
    %675 = vmatpush1.bf16.msra.mxu0 0
    %676 = vmatprep.subr.bf16.mxu0 0
    %677 = vmatpush1.bf16.msra.mxu0 0
    %678 = vmatprep.mubr.bf16.mxu0 0
    %679 = vmatmul.mubr.bf16.gmra.mrb[0].mxu0 %v182
    %v680 = vpop.f32.mrb[0].mxu0
    %v681 = vadd.f32 %v641, %v680
    %v682 = vpop.f32.mrb[0].mxu0
    %v683 = vpop.f32.mrb[0].mxu0
    %v684 = vpop.f32.mrb[0].mxu0
    %685 = vdwg.mxu0
    %v686 = vmax.f32 %v681, 0.0
    %687 = vst [vmem:[#allocation7] sm:$0xff] %v686
    // Predicated region
    $region22: #{tpu_custom_call.1} parent=1 // pred_check
      _
    $region23: #{tpu_custom_call.1} parent=1 // pred_check_branch
      %689 = sbr.rel (0) target = $region25
    $region24: #{tpu_custom_call.1} parent=1 // pred_region
      %s691 = ssub.s32 128, 128
      %692 = vsyncadd [#allocation4], %s691
      %s694 = sshll.u32 [#allocation7], 4
      %s695 = int_to_ptr.vmem [resolvable:$true] %s694
      %697 = dma.vmem_to_hbm [thread:$0]  %s695, 128, %s3, [#allocation4]
    $region25: #{tpu_custom_call.1} parent=1 // pred_fallthru
      _
    // Predicated region
    $region26: #{tpu_custom_call.1} parent=1 // pred_check
      _
    $region27: #{tpu_custom_call.1} parent=1 // pred_check_branch
      %699 = sbr.rel (0) target = $region29
    $region28: #{tpu_custom_call.1} parent=1 // pred_region
      %700 = dma.done [#allocation4], 128
    $region29: #{tpu_custom_call.1} parent=1 // pred_fallthru
      _
    %701 = vsyncpa [#allocation3], 1
    %702 = vsyncpa [#allocation6], 1
    %703 = vsyncpa [#allocation4], 1

</llo_original>
